<compile_context>
chip_gen: v6e
topology: v6e:2x2x1
jax: 0.10.0
libtpu: 0.0.40
codegen_flags: <defaults>
</compile_context>

<pallas_src>
import jax
import jax.numpy as jnp
from jax.experimental import pallas as pl
from jax.experimental.pallas import tpu as pltpu


_LANE = 128
# ~4 MiB blocks: (2 inputs + 2 outputs double-buffered) ~= 16 MiB of block
# buffers, covered by the explicit vmem_limit_bytes below (physical VMEM is
# 64 MiB on v7x and 128 MiB on v5e/v6e, so the raised limit is safe everywhere).
_TARGET_BLOCK_BYTES = 4 * 1024 * 1024
_RAGGED_BLOCK_BYTES = 2 * 1024 * 1024
_ELEMENTWISE_VMEM_LIMIT = 32 * 1024 * 1024
_MIN_GRID_STEPS = 4          # >= 2 pipelined iterations per TC on a v7x megacore

# SE kernel: in + out blocks, each double-buffered -> 4 * C * HW * itemsize.
_SE_MAX_BLOCK_BYTES = 24 * 1024 * 1024
_SE_VMEM_LIMIT = 32 * 1024 * 1024


def _round_up(v: int, m: int) -> int:
    return -(-v // m) * m


# ----------------------------------------------------------------------------
# Standalone elementwise activations (Hardsigmoid / Hardswish)
# ----------------------------------------------------------------------------

def _hardsigmoid_kernel(x_ref, o_ref):
    x = x_ref[...]
    o_ref[...] = (jnp.clip(x + 3.0, 0.0, 6.0) * (1.0 / 6.0)).astype(o_ref.dtype)


def _hardswish_kernel(x_ref, o_ref):
    x = x_ref[...]
    o_ref[...] = (x * (jnp.clip(x + 3.0, 0.0, 6.0) * (1.0 / 6.0))).astype(o_ref.dtype)


# Plain-jnp variants for call sites right after the lax.conv / BN backbone:
# XLA fuses these into the conv epilogue, avoiding the extra HBM round-trip a
# pallas_call fusion barrier would force.
def hardsigmoid_jnp(x):
    return jnp.clip(x + 3.0, 0.0, 6.0) * (1.0 / 6.0)


def hardswish_jnp(x):
    return x * (jnp.clip(x + 3.0, 0.0, 6.0) * (1.0 / 6.0))


def _pick_block_rows(rows: int, width: int, itemsize: int) -> int:
    if rows <= 32:
        return rows                      # full-extent block is always legal
    bytes_per_row = width * itemsize
    block_rows = max(32, (_TARGET_BLOCK_BYTES // bytes_per_row) // 32 * 32)
    block_rows = min(block_rows, _round_up(rows, 32))
    if rows >= _MIN_GRID_STEPS * 32:
        # At least _MIN_GRID_STEPS grid steps when there is enough work, so a
        # v7x megacore gets >= 2 pipelined iterations per TensorCore.
        block_rows = min(block_rows, _round_up(pl.cdiv(rows, _MIN_GRID_STEPS), 32))
    return block_rows


def _elementwise_pallas(kernel_body, x):
    """Run an elementwise kernel over x viewed as a wide lane-dense slab."""
    orig_shape = x.shape
    dtype = x.dtype
    total = int(x.size)
    itemsize = jnp.dtype(dtype).itemsize
    cparams = pltpu.CompilerParams(
        dimension_semantics=("parallel",),
        vmem_limit_bytes=_ELEMENTWISE_VMEM_LIMIT,
    )

    # Widest lane-dense slab width (multiple of 128) dividing the element
    # count, so reshape is free and every store is an unmasked full-lane vst.
    width = None
    for cand in (4096, 2048, 1024, 512, 256, 128):
        if total % cand == 0:
            width = cand
            break

    if width is not None:
        rows = total // width
        x2d = jnp.ravel(x).reshape(rows, width)        # free reshape, no HBM pass
        block_rows = _pick_block_rows(rows, width, itemsize)
        out2d = pl.pallas_call(
            kernel_body,
            out_shape=jax.ShapeDtypeStruct((rows, width), dtype),
            grid_spec=pltpu.PrefetchScalarGridSpec(
                num_scalar_prefetch=0,
                grid=(pl.cdiv(rows, block_rows),),
                in_specs=[pl.BlockSpec((block_rows, width), lambda i: (i, 0))],
                out_specs=pl.BlockSpec((block_rows, width), lambda i: (i, 0)),
            ),
            compiler_params=cparams,
        )(x2d)
        return out2d.reshape(orig_shape)

    # Rare non-128-aligned case: 1-D ragged grid — no jnp.pad / trailing-slice
    # HBM passes. Pallas pads the read of the partial last block and masks its
    # writeback, so the garbage tail never reaches the output.
    x1d = jnp.ravel(x)
    block_elems = max(_LANE, (_RAGGED_BLOCK_BYTES // itemsize) // _LANE * _LANE)
    if block_elems >= total:
        block_elems = total              # full-extent block is always legal
    out1d = pl.pallas_call(
        kernel_body,
        out_shape=jax.ShapeDtypeStruct((total,), dtype),
        grid_spec=pltpu.PrefetchScalarGridSpec(
            num_scalar_prefetch=0,
            grid=(pl.cdiv(total, block_elems),),
            in_specs=[pl.BlockSpec((block_elems,), lambda i: (i,))],
            out_specs=pl.BlockSpec((block_elems,), lambda i: (i,)),
        ),
        compiler_params=cparams,
    )(x1d)
    return out1d.reshape(orig_shape)


def hardsigmoid(x: jax.Array) -> jax.Array:
    """y = relu6(x + 3) / 6 as a standalone Pallas kernel."""
    return _elementwise_pallas(_hardsigmoid_kernel, x)


def hardswish(x: jax.Array) -> jax.Array:
    """y = x * relu6(x + 3) / 6 as a standalone Pallas kernel."""
    return _elementwise_pallas(_hardswish_kernel, x)


# ----------------------------------------------------------------------------
# Fused SEModule: avg-pool -> 1x1 conv -> ReLU -> 1x1 conv -> hardsigmoid -> mul
# One Pallas kernel per batch element; the gate never hits HBM. The FC layers
# are matvecs, computed with broadcast-multiply + sublane/lane reductions
# (VPU/XLU) — no degenerate 1-row MXU matmuls.
# ----------------------------------------------------------------------------

def _se_kernel_nchw(x_ref, w1t_ref, b1_ref, w2_ref, b2_ref, o_ref):
    # x_ref: (1, C, HW); w1t: (C, Cr); b1: (1, Cr); w2: (C, Cr); b2: (C, 1)
    x = x_ref[0]                                                     # (C, HW) native dtype
    pooled = jnp.mean(x, axis=1, keepdims=True, dtype=jnp.float32)   # (C, 1) f32 accum
    z = jnp.sum(w1t_ref[...] * pooled, axis=0, keepdims=True) + b1_ref[...]   # (1, Cr)
    z = jnp.maximum(z, 0.0)
    g = jnp.sum(w2_ref[...] * z, axis=1, keepdims=True) + b2_ref[...]         # (C, 1)
    g = jnp.clip(g + 3.0, 0.0, 6.0) * (1.0 / 6.0)
    o_ref[0] = (x * g.astype(x.dtype)).astype(o_ref.dtype)


def _se_kernel_nhwc(x_ref, w1_ref, b1_ref, w2t_ref, b2_ref, o_ref):
    # x_ref: (1, HW, C); w1: (Cr, C); b1: (Cr, 1); w2t: (Cr, C); b2: (1, C)
    x = x_ref[0]                                                     # (HW, C), C on lanes
    pooled = jnp.mean(x, axis=0, keepdims=True, dtype=jnp.float32)   # (1, C) f32 accum
    z = jnp.sum(w1_ref[...] * pooled, axis=1, keepdims=True) + b1_ref[...]    # (Cr, 1)
    z = jnp.maximum(z, 0.0)
    g = jnp.sum(w2t_ref[...] * z, axis=0, keepdims=True) + b2_ref[...]        # (1, C)
    g = jnp.clip(g + 3.0, 0.0, 6.0) * (1.0 / 6.0)
    o_ref[0] = (x * g.astype(x.dtype)).astype(o_ref.dtype)


def _se_gate_from_pooled(pooled_f32, w1, b1, w2, b2):
    """Pure-jnp gate (used for the VMEM-overflow fallback and as reference)."""
    cr = w1.shape[0]
    c = w2.shape[0]
    w1m = w1.reshape(cr, c).astype(jnp.float32)
    w2m = w2.reshape(c, cr).astype(jnp.float32)
    z = jax.nn.relu(
        jnp.einsum("nc,jc->nj", pooled_f32, w1m,
                   precision=jax.lax.Precision.HIGHEST)
        + b1.reshape(1, cr).astype(jnp.float32))
    g = (jnp.einsum("nj,cj->nc", z, w2m,
                    precision=jax.lax.Precision.HIGHEST)
         + b2.reshape(1, c).astype(jnp.float32))
    return jnp.clip(g + 3.0, 0.0, 6.0) * (1.0 / 6.0)


def se_module(x, w1, b1, w2, b2):
    """Fused SEModule forward, NCHW activations (PyTorch layout).

    x:  (N, C, H, W);  w1: (C//r, C[,1,1]), b1: (C//r,);
    w2: (C, C//r[,1,1]), b2: (C,).
    """
    n, c, h, w = x.shape
    cr = w1.shape[0]
    hw = h * w
    itemsize = jnp.dtype(x.dtype).itemsize

    # VMEM-fit guard: in + out blocks, each double-buffered by the pipeline.
    if 4 * c * hw * itemsize > _SE_MAX_BLOCK_BYTES:
        # TODO(synk): HW-chunked Pallas fallback with a scratch pool accumulator.
        pooled = jnp.mean(x, axis=(2, 3), dtype=jnp.float32)
        gate = _se_gate_from_pooled(pooled, w1, b1, w2, b2)
        return x * gate[:, :, None, None].astype(x.dtype)

    x3 = x.reshape(n, c, hw)                           # free reshape (contiguous)
    w1t = w1.reshape(cr, c).T.astype(jnp.float32)      # (C, Cr): tiny, one-time
    b1r = b1.reshape(1, cr).astype(jnp.float32)
    w2r = w2.reshape(c, cr).astype(jnp.float32)        # (C, Cr)
    b2r = b2.reshape(c, 1).astype(jnp.float32)

    out3 = pl.pallas_call(
        _se_kernel_nchw,
        out_shape=jax.ShapeDtypeStruct((n, c, hw), x.dtype),
        grid_spec=pltpu.PrefetchScalarGridSpec(
            num_scalar_prefetch=0,
            grid=(n,),
            in_specs=[
                pl.BlockSpec((1, c, hw), lambda i: (i, 0, 0)),
                pl.BlockSpec((c, cr), lambda i: (0, 0)),
                pl.BlockSpec((1, cr), lambda i: (0, 0)),
                pl.BlockSpec((c, cr), lambda i: (0, 0)),
                pl.BlockSpec((c, 1), lambda i: (0, 0)),
            ],
            out_specs=pl.BlockSpec((1, c, hw), lambda i: (i, 0, 0)),
        ),
        compiler_params=pltpu.CompilerParams(
            dimension_semantics=("parallel",),
            vmem_limit_bytes=_SE_VMEM_LIMIT),
    )(x3, w1t, b1r, w2r, b2r)
    return out3.reshape(n, c, h, w)


def se_module_nhwc(x, w1, b1, w2, b2):
    """Fused SEModule forward, NHWC activations.

    Lane dimension is C (128/256/512 in PP-LCNet), so 7x7 / 14x14 spatial
    sizes stay lane-dense (no masked partial stores).
    """
    n, h, w, c = x.shape
    cr = w1.shape[0]
    hw = h * w
    itemsize = jnp.dtype(x.dtype).itemsize

    if 4 * c * hw * itemsize > _SE_MAX_BLOCK_BYTES:
        pooled = jnp.mean(x, axis=(1, 2), dtype=jnp.float32)
        gate = _se_gate_from_pooled(pooled, w1, b1, w2, b2)
        return x * gate[:, None, None, :].astype(x.dtype)

    x3 = x.reshape(n, hw, c)                           # free reshape (contiguous)
    w1r = w1.reshape(cr, c).astype(jnp.float32)        # (Cr, C)
    b1r = b1.reshape(cr, 1).astype(jnp.float32)
    w2t = w2.reshape(c, cr).T.astype(jnp.float32)      # (Cr, C)
    b2r = b2.reshape(1, c).astype(jnp.float32)

    out3 = pl.pallas_call(
        _se_kernel_nhwc,
        out_shape=jax.ShapeDtypeStruct((n, hw, c), x.dtype),
        grid_spec=pltpu.PrefetchScalarGridSpec(
            num_scalar_prefetch=0,
            grid=(n,),
            in_specs=[
                pl.BlockSpec((1, hw, c), lambda i: (i, 0, 0)),
                pl.BlockSpec((cr, c), lambda i: (0, 0)),
                pl.BlockSpec((cr, 1), lambda i: (0, 0)),
                pl.BlockSpec((cr, c), lambda i: (0, 0)),
                pl.BlockSpec((1, c), lambda i: (0, 0)),
            ],
            out_specs=pl.BlockSpec((1, hw, c), lambda i: (i, 0, 0)),
        ),
        compiler_params=pltpu.CompilerParams(
            dimension_semantics=("parallel",),
            vmem_limit_bytes=_SE_VMEM_LIMIT),
    )(x3, w1r, b1r, w2t, b2r)
    return out3.reshape(n, h, w, c)


# ----------------------------------------------------------------------------
# Demo + correctness checks
# ----------------------------------------------------------------------------

if __name__ == "__main__":
    key = jax.random.PRNGKey(0)
    keys = jax.random.split(key, 10)

    # ---- fused SE module, NCHW, f32 (128-aligned HW) ----
    N, C, H, W = 2, 256, 16, 16
    Cr = C // 4
    x_se = jax.random.normal(keys[0], (N, C, H, W), dtype=jnp.float32)
    w1 = jax.random.normal(keys[1], (Cr, C), dtype=jnp.float32) * 0.05
    b1 = jax.random.normal(keys[2], (Cr,), dtype=jnp.float32) * 0.05
    w2 = jax.random.normal(keys[3], (C, Cr), dtype=jnp.float32) * 0.05
    b2 = jax.random.normal(keys[4], (C,), dtype=jnp.float32) * 0.05

    y_se = se_module(x_se, w1, b1, w2, b2)
    jax.block_until_ready(y_se)
    gate_ref = _se_gate_from_pooled(
        jnp.mean(x_se, axis=(2, 3), dtype=jnp.float32), w1, b1, w2, b2)
    y_se_ref = x_se * gate_ref[:, :, None, None]
    assert y_se.shape == x_se.shape and y_se.dtype == x_se.dtype
    assert jnp.max(jnp.abs(y_se - y_se_ref)) < 1e-4

    # ---- fused SE module, NHWC, bf16 (7x7 spatial, C on lanes) ----
    Nh, Hh, Wh, Ch = 2, 7, 7, 256
    Crh = Ch // 4
    x_nhwc = jax.random.normal(keys[5], (Nh, Hh, Wh, Ch), dtype=jnp.float32)
    w1h = jax.random.normal(keys[6], (Crh, Ch), dtype=jnp.float32) * 0.05
    b1h = jax.random.normal(keys[7], (Crh,), dtype=jnp.float32) * 0.05
    w2h = jax.random.normal(keys[8], (Ch, Crh), dtype=jnp.float32) * 0.05
    b2h = jax.random.normal(keys[9], (Ch,), dtype=jnp.float32) * 0.05
    x_bf16 = x_nhwc.astype(jnp.bfloat16)

    y_nhwc = se_module_nhwc(x_bf16, w1h, b1h, w2h, b2h)
    jax.block_until_ready(y_nhwc)
    gate_h = _se_gate_from_pooled(
        jnp.mean(x_bf16, axis=(1, 2), dtype=jnp.float32), w1h, b1h, w2h, b2h)
    y_nhwc_ref = x_bf16 * gate_h[:, None, None, :].astype(jnp.bfloat16)
    assert y_nhwc.shape == x_bf16.shape and y_nhwc.dtype == jnp.bfloat16
    assert jnp.max(jnp.abs(y_nhwc.astype(jnp.float32)
                           - y_nhwc_ref.astype(jnp.float32))) < 5e-2

    # ---- standalone activation: lane-dense 128-aligned path ----
    x_hsw = jax.random.normal(keys[0], (2, 256, 32, 32), dtype=jnp.float32) * 4.0
    y_hsw = hardswish(x_hsw)
    jax.block_until_ready(y_hsw)
    y_hsw_ref = x_hsw * (jnp.clip(x_hsw + 3.0, 0.0, 6.0) * (1.0 / 6.0))
    assert y_hsw.shape == x_hsw.shape and y_hsw.dtype == x_hsw.dtype
    assert jnp.max(jnp.abs(y_hsw - y_hsw_ref)) < 1e-6

    # ---- standalone activation: ragged (non-128-aligned) path, 2 grid steps ----
    x_hsig = jax.random.normal(keys[1], (600, 1003), dtype=jnp.float32) * 4.0
    y_hsig = hardsigmoid(x_hsig)
    jax.block_until_ready(y_hsig)
    y_hsig_ref = jnp.clip(x_hsig + 3.0, 0.0, 6.0) * (1.0 / 6.0)
    assert y_hsig.shape == x_hsig.shape and y_hsig.dtype == x_hsig.dtype
    assert jnp.max(jnp.abs(y_hsig - y_hsig_ref)) < 1e-6

    print("KERNEL_OK")
</pallas_src>

<mosaic_0001>
module attributes {stable_mosaic.version = 11 : i64} {
  func.func @_se_kernel_nchw(%arg0: i32, %arg1: memref<1x256x256xf32, #tpu.memory_space<vmem>>, %arg2: memref<256x64xf32, #tpu.memory_space<vmem>>, %arg3: memref<1x64xf32, #tpu.memory_space<vmem>>, %arg4: memref<256x64xf32, #tpu.memory_space<vmem>>, %arg5: memref<256x1xf32, #tpu.memory_space<vmem>>, %arg6: memref<1x256x256xf32, #tpu.memory_space<vmem>>) attributes {dimension_semantics = [#tpu.dimension_semantics<parallel>], iteration_bounds = array<i64: 2>, scalar_prefetch = 0 : i64, scratch_operands = 0 : i64, tpu.core_type = #tpu.core_type<tc>, window_params = [{transform_indices = @transform_0, window_bounds = array<i64: 1, 256, 256>}, {pipeline_mode = #tpu.pipeline_mode<synchronous>, transform_indices = @transform_1, window_bounds = array<i64: 256, 64>}, {pipeline_mode = #tpu.pipeline_mode<synchronous>, transform_indices = @transform_2, window_bounds = array<i64: 1, 64>}, {pipeline_mode = #tpu.pipeline_mode<synchronous>, transform_indices = @transform_3, window_bounds = array<i64: 256, 64>}, {pipeline_mode = #tpu.pipeline_mode<synchronous>, transform_indices = @transform_4, window_bounds = array<i64: 256, 1>}, {transform_indices = @transform_5, window_bounds = array<i64: 1, 256, 256>}]} {
    %c0 = arith.constant 0 : index
    %c0_0 = arith.constant 0 : index
    %c0_1 = arith.constant 0 : index
    %0 = vector.load %arg1[%c0, %c0_0, %c0_1] : memref<1x256x256xf32, #tpu.memory_space<vmem>>, vector<1x256x256xf32>
    %1 = vector.shape_cast %0 : vector<1x256x256xf32> to vector<256x256xf32>
    %cst = arith.constant dense<0.000000e+00> : vector<256xf32>
    %2 = vector.multi_reduction <add>, %1, %cst [1] : vector<256x256xf32> to vector<256xf32>
    %3 = vector.shape_cast %2 : vector<256xf32> to vector<256x1xf32>
    %cst_2 = arith.constant 2.560000e+02 : f32
    %4 = vector.broadcast %cst_2 : f32 to vector<256x1xf32>
    %5 = arith.divf %3, %4 : vector<256x1xf32>
    %c0_3 = arith.constant 0 : index
    %c0_4 = arith.constant 0 : index
    %6 = vector.load %arg2[%c0_3, %c0_4] : memref<256x64xf32, #tpu.memory_space<vmem>>, vector<256x64xf32>
    %7 = vector.broadcast %5 : vector<256x1xf32> to vector<256x64xf32>
    %8 = arith.mulf %6, %7 : vector<256x64xf32>
    %cst_5 = arith.constant dense<0.000000e+00> : vector<64xf32>
    %9 = vector.multi_reduction <add>, %8, %cst_5 [0] : vector<256x64xf32> to vector<64xf32>
    %10 = vector.shape_cast %9 : vector<64xf32> to vector<1x64xf32>
    %c0_6 = arith.constant 0 : index
    %c0_7 = arith.constant 0 : index
    %11 = vector.load %arg3[%c0_6, %c0_7] : memref<1x64xf32, #tpu.memory_space<vmem>>, vector<1x64xf32>
    %12 = arith.addf %10, %11 : vector<1x64xf32>
    %cst_8 = arith.constant 0.000000e+00 : f32
    %13 = vector.broadcast %cst_8 : f32 to vector<1x64xf32>
    %14 = arith.maximumf %12, %13 : vector<1x64xf32>
    %c0_9 = arith.constant 0 : index
    %c0_10 = arith.constant 0 : index
    %15 = vector.load %arg4[%c0_9, %c0_10] : memref<256x64xf32, #tpu.memory_space<vmem>>, vector<256x64xf32>
    %16 = vector.broadcast %14 : vector<1x64xf32> to vector<256x64xf32>
    %17 = arith.mulf %15, %16 : vector<256x64xf32>
    %cst_11 = arith.constant dense<0.000000e+00> : vector<256xf32>
    %18 = vector.multi_reduction <add>, %17, %cst_11 [1] : vector<256x64xf32> to vector<256xf32>
    %19 = vector.shape_cast %18 : vector<256xf32> to vector<256x1xf32>
    %c0_12 = arith.constant 0 : index
    %c0_13 = arith.constant 0 : index
    %20 = vector.load %arg5[%c0_12, %c0_13] : memref<256x1xf32, #tpu.memory_space<vmem>>, vector<256x1xf32>
    %21 = arith.addf %19, %20 : vector<256x1xf32>
    %cst_14 = arith.constant 3.000000e+00 : f32
    %22 = vector.broadcast %cst_14 : f32 to vector<256x1xf32>
    %23 = arith.addf %21, %22 : vector<256x1xf32>
    %cst_15 = arith.constant 0.000000e+00 : f32
    %cst_16 = arith.constant 6.000000e+00 : f32
    %24 = vector.broadcast %cst_15 : f32 to vector<256x1xf32>
    %25 = arith.maximumf %24, %23 : vector<256x1xf32>
    %26 = vector.broadcast %cst_16 : f32 to vector<256x1xf32>
    %27 = arith.minimumf %26, %25 : vector<256x1xf32>
    %cst_17 = arith.constant 0.166666672 : f32
    %28 = vector.broadcast %cst_17 : f32 to vector<256x1xf32>
    %29 = arith.mulf %27, %28 : vector<256x1xf32>
    %30 = vector.broadcast %29 : vector<256x1xf32> to vector<256x256xf32>
    %31 = arith.mulf %1, %30 : vector<256x256xf32>
    %c0_18 = arith.constant 0 : index
    %c0_19 = arith.constant 0 : index
    %c0_20 = arith.constant 0 : index
    %32 = vector.load %arg6[%c0_18, %c0_19, %c0_20] : memref<1x256x256xf32, #tpu.memory_space<vmem>>, vector<1x256x256xf32>
    %33 = vector.shape_cast %32 : vector<1x256x256xf32> to vector<256x256xf32>
    %34 = vector.shape_cast %31 : vector<256x256xf32> to vector<1x256x256xf32>
    tpu.vector_store %arg6[%c0_18, %c0_19, %c0_20], %34 {strides = array<i32>} : memref<1x256x256xf32, #tpu.memory_space<vmem>>, vector<1x256x256xf32>,
    return
  }
  func.func @transform_0(%arg0: i32) -> (i32, i32, i32) {
    %c0_i32 = arith.constant 0 : i32
    %c0_i32_0 = arith.constant 0 : i32
    %c0_i32_1 = arith.constant 0 : i32
    return %arg0, %c0_i32, %c0_i32_0 : i32, i32, i32
  }
  func.func @transform_1(%arg0: i32) -> (i32, i32) {
    %c0_i32 = arith.constant 0 : i32
    %c0_i32_0 = arith.constant 0 : i32
    %c0_i32_1 = arith.constant 0 : i32
    return %c0_i32, %c0_i32_0 : i32, i32
  }
  func.func @transform_2(%arg0: i32) -> (i32, i32) {
    %c0_i32 = arith.constant 0 : i32
    %c0_i32_0 = arith.constant 0 : i32
    %c0_i32_1 = arith.constant 0 : i32
    return %c0_i32, %c0_i32_0 : i32, i32
  }
  func.func @transform_3(%arg0: i32) -> (i32, i32) {
    %c0_i32 = arith.constant 0 : i32
    %c0_i32_0 = arith.constant 0 : i32
    %c0_i32_1 = arith.constant 0 : i32
    return %c0_i32, %c0_i32_0 : i32, i32
  }
  func.func @transform_4(%arg0: i32) -> (i32, i32) {
    %c0_i32 = arith.constant 0 : i32
    %c0_i32_0 = arith.constant 0 : i32
    %c0_i32_1 = arith.constant 0 : i32
    return %c0_i32, %c0_i32_0 : i32, i32
  }
  func.func @transform_5(%arg0: i32) -> (i32, i32, i32) {
    %c0_i32 = arith.constant 0 : i32
    %c0_i32_0 = arith.constant 0 : i32
    %c0_i32_1 = arith.constant 0 : i32
    return %arg0, %c0_i32, %c0_i32_0 : i32, i32, i32
  }
}

</mosaic_0001>

<llo_original>
// kernel: tpu_custom_call.1
$region0: #{tpu_custom_call.1}
  #allocation0 [shape = 'u32[]', space=smem, size = 0x4, offset = 0x4, fixed_abs, tag = 'smem constant byte address 0x4 - core index']
  #allocation1 [shape = 'u32[144,128]{1,0:T(1,128)}', space=vmem, size = 0x12000, scoped, tag = 'internal scratch']
  %s0 = inlined_call_operand.vmem [shape: f32[2,256,256], index: 0, kind: input, shape index: {}]
  %s1 = inlined_call_operand.vmem [shape: f32[256,64], index: 1, kind: input, shape index: {}]
  %s2 = inlined_call_operand.vmem [shape: f32[1,64], index: 2, kind: input, shape index: {}]
  %s3 = inlined_call_operand.vmem [shape: f32[256,64], index: 3, kind: input, shape index: {}]
  %s4 = inlined_call_operand.vmem [shape: f32[256,1], index: 4, kind: input, shape index: {}]
  %s5 = inlined_call_operand.hbm [shape: f32[2,256,256], index: 5, kind: output, shape index: {}]
  %s6 = sld [smem:[#allocation0]]
  $region53: #{tpu_custom_call.1} parent=0
    _
  %s8 = ssub.s32 1, %s6
  %s9 = scalar_select 0, %s8, %s6
  $region1: #{tpu_custom_call.1} parent=0
    #allocation2 [shape = 'u8[524288]{0}', space=vmem, size = 0x80000, scoped, tag = 'output window, operand 0']
    #allocation3 [shape = 's32[2]{0}', space=sflag, size = 0x8, scoped, tag = 'scoped memory for tpu_custom_call.1']
    %10 = vsyncpa [#allocation3], 0
    %s11 = scalar_lea.sflag [#allocation3], 1
    %12 = vsyncpa %s11, 0
    loop: start=0, step=1, limit=4
    $region2: #{tpu_custom_call.1} parent=1 // loop_pre_header
      _
    $region3: #{tpu_custom_call.1} parent=1 // loop_header
      %s14 = sphi 0, %s18
      %p15 = scmp.ge.s32.totalorder %s14, 4
      %s24 = sphi 0, %s26
      %s27 = sphi 0, %s24
      %s28 = sphi 0, %s27
      %s44 = sphi 0, %s28
      %s48 = sphi 0, %s48
      %s50 = sphi 0, %s48
      %s51 = sphi 0, %s50
      %s65 = sphi 0, %s51
      %s69 = sphi 0, %s69
      %s71 = sphi 0, %s69
      %s72 = sphi 0, %s71
      %s86 = sphi 0, %s72
      %s90 = sphi 0, %s90
      %s92 = sphi 0, %s90
      %s93 = sphi 0, %s92
      %s107 = sphi 0, %s93
      %s111 = sphi 0, %s111
      %s113 = sphi 0, %s111
      %s114 = sphi 0, %s113
      %s128 = sphi 0, %s114
      %s134 = sphi 0, %s136
      %s137 = sphi 0, %s134
      %s138 = sphi 0, %s137
      %s154 = sphi 0, %s138
    $region4: #{tpu_custom_call.1} parent=1 // loop_header_branch
      %17 = sbr.rel (%p15) target = $region8
    $region5: #{tpu_custom_call.1} parent=1 // loop_body
      %s19 = ssub.s32 %s14, 1
      %s20 = ssub.s32 %s14, 2
      %s21 = sadd.s32 %s14, 1
      %s22 = ssub.s32 %s14, %s21
      %p23 = scmp.eq.s32.totalorder %s22, 0
      %s25 = sadd.s32 %s24, 1
      %s26 = scalar_select %p23, %s24, %s25
      %p29 = pneg %p23
      %p30 = scmp.eq.s32.totalorder %s14, 1
      %p31 = por %p29, %p30
      %p32 = scmp.ne.s32.totalorder %s24, %s27
      %p33 = scmp.eq.s32.totalorder %s14, 0
      %p34 = por %p32, %p33
      %p35 = scmp.ne.s32.totalorder %s24, %s27
      %p36 = scmp.eq.s32.totalorder %s19, 1
      %p37 = por %p35, %p36
      %p38 = scmp.ne.s32.totalorder %s27, %s28
      %p39 = scmp.eq.s32.totalorder %s19, 0
      %p40 = por %p38, %p39
      %p41 = scmp.ne.s32.totalorder %s27, %s28
      %p42 = scmp.eq.s32.totalorder %s20, 1
      %p43 = por %p41, %p42
      %p45 = scmp.ne.s32.totalorder %s28, %s44
      %p46 = scmp.eq.s32.totalorder %s20, 0
      %p47 = por %p45, %p46
      %s49 = sadd.s32 %s48, 1
      %p52 = scmp.eq.s32.totalorder %s14, 1
      %p53 = scmp.ne.s32.totalorder %s48, %s50
      %p54 = scmp.eq.s32.totalorder %s14, 0
      %p55 = por %p53, %p54
      %p56 = scmp.ne.s32.totalorder %s48, %s50
      %p57 = scmp.eq.s32.totalorder %s19, 1
      %p58 = por %p56, %p57
      %p59 = scmp.ne.s32.totalorder %s50, %s51
      %p60 = scmp.eq.s32.totalorder %s19, 0
      %p61 = por %p59, %p60
      %p62 = scmp.ne.s32.totalorder %s50, %s51
      %p63 = scmp.eq.s32.totalorder %s20, 1
      %p64 = por %p62, %p63
      %p66 = scmp.ne.s32.totalorder %s51, %s65
      %p67 = scmp.eq.s32.totalorder %s20, 0
      %p68 = por %p66, %p67
      %s70 = sadd.s32 %s69, 1
      %p73 = scmp.eq.s32.totalorder %s14, 1
      %p74 = scmp.ne.s32.totalorder %s69, %s71
      %p75 = scmp.eq.s32.totalorder %s14, 0
      %p76 = por %p74, %p75
      %p77 = scmp.ne.s32.totalorder %s69, %s71
      %p78 = scmp.eq.s32.totalorder %s19, 1
      %p79 = por %p77, %p78
      %p80 = scmp.ne.s32.totalorder %s71, %s72
      %p81 = scmp.eq.s32.totalorder %s19, 0
      %p82 = por %p80, %p81
      %p83 = scmp.ne.s32.totalorder %s71, %s72
      %p84 = scmp.eq.s32.totalorder %s20, 1
      %p85 = por %p83, %p84
      %p87 = scmp.ne.s32.totalorder %s72, %s86
      %p88 = scmp.eq.s32.totalorder %s20, 0
      %p89 = por %p87, %p88
      %s91 = sadd.s32 %s90, 1
      %p94 = scmp.eq.s32.totalorder %s14, 1
      %p95 = scmp.ne.s32.totalorder %s90, %s92
      %p96 = scmp.eq.s32.totalorder %s14, 0
      %p97 = por %p95, %p96
      %p98 = scmp.ne.s32.totalorder %s90, %s92
      %p99 = scmp.eq.s32.totalorder %s19, 1
      %p100 = por %p98, %p99
      %p101 = scmp.ne.s32.totalorder %s92, %s93
      %p102 = scmp.eq.s32.totalorder %s19, 0
      %p103 = por %p101, %p102
      %p104 = scmp.ne.s32.totalorder %s92, %s93
      %p105 = scmp.eq.s32.totalorder %s20, 1
      %p106 = por %p104, %p105
      %p108 = scmp.ne.s32.totalorder %s93, %s107
      %p109 = scmp.eq.s32.totalorder %s20, 0
      %p110 = por %p108, %p109
      %s112 = sadd.s32 %s111, 1
      %p115 = scmp.eq.s32.totalorder %s14, 1
      %p116 = scmp.ne.s32.totalorder %s111, %s113
      %p117 = scmp.eq.s32.totalorder %s14, 0
      %p118 = por %p116, %p117
      %p119 = scmp.ne.s32.totalorder %s111, %s113
      %p120 = scmp.eq.s32.totalorder %s19, 1
      %p121 = por %p119, %p120
      %p122 = scmp.ne.s32.totalorder %s113, %s114
      %p123 = scmp.eq.s32.totalorder %s19, 0
      %p124 = por %p122, %p123
      %p125 = scmp.ne.s32.totalorder %s113, %s114
      %p126 = scmp.eq.s32.totalorder %s20, 1
      %p127 = por %p125, %p126
      %p129 = scmp.ne.s32.totalorder %s114, %s128
      %p130 = scmp.eq.s32.totalorder %s20, 0
      %p131 = por %p129, %p130
      %s132 = ssub.s32 %s14, %s21
      %p133 = scmp.eq.s32.totalorder %s132, 0
      %s135 = sadd.s32 %s134, 1
      %s136 = scalar_select %p133, %s134, %s135
      %p139 = pneg %p133
      %p140 = scmp.eq.s32.totalorder %s14, 1
      %p141 = por %p139, %p140
      %p142 = scmp.ne.s32.totalorder %s134, %s137
      %p143 = scmp.eq.s32.totalorder %s14, 0
      %p144 = por %p142, %p143
      %p145 = scmp.ne.s32.totalorder %s134, %s137
      %p146 = scmp.eq.s32.totalorder %s19, 1
      %p147 = por %p145, %p146
      %p148 = scmp.ne.s32.totalorder %s137, %s138
      %p149 = scmp.eq.s32.totalorder %s19, 0
      %p150 = por %p148, %p149
      %p151 = scmp.ne.s32.totalorder %s137, %s138
      %p152 = scmp.eq.s32.totalorder %s20, 1
      %p153 = por %p151, %p152
      %p155 = scmp.ne.s32.totalorder %s138, %s154
      %p156 = scmp.eq.s32.totalorder %s20, 0
      %p157 = por %p155, %p156
      %p158 = scmp.le.s32.totalorder 1, %s14
      %p159 = scmp.lt.s32.totalorder %s14, 3
      %p160 = pnand %p158, %p159
      %p161 = pneg %p160
      // Predicated region
      $region9: #{tpu_custom_call.1} parent=5 // pred_check
        _
      $region10: #{tpu_custom_call.1} parent=5 // pred_check_branch
        %163 = sbr.rel (%p160) target = $region12
      $region11: #{tpu_custom_call.1} parent=5 // pred_region
        %s164 = ssub.s32 %s14, 1
        // Predicated region
        $region13: #{tpu_custom_call.1} parent=11 // pred_check
          %p165 = pneg %p61
        $region14: #{tpu_custom_call.1} parent=11 // pred_check_branch
          %167 = sbr.rel (%p165) target = $region16
        $region15: #{tpu_custom_call.1} parent=11 // pred_region
          _
        $region16: #{tpu_custom_call.1} parent=11 // pred_fallthru
          _
        // Predicated region
        $region17: #{tpu_custom_call.1} parent=11 // pred_check
          %p168 = pneg %p82
        $region18: #{tpu_custom_call.1} parent=11 // pred_check_branch
          %170 = sbr.rel (%p168) target = $region20
        $region19: #{tpu_custom_call.1} parent=11 // pred_region
          _
        $region20: #{tpu_custom_call.1} parent=11 // pred_fallthru
          _
        // Predicated region
        $region21: #{tpu_custom_call.1} parent=11 // pred_check
          %p171 = pneg %p103
        $region22: #{tpu_custom_call.1} parent=11 // pred_check_branch
          %173 = sbr.rel (%p171) target = $region24
        $region23: #{tpu_custom_call.1} parent=11 // pred_region
          _
        $region24: #{tpu_custom_call.1} parent=11 // pred_fallthru
          _
        // Predicated region
        $region25: #{tpu_custom_call.1} parent=11 // pred_check
          %p174 = pneg %p124
        $region26: #{tpu_custom_call.1} parent=11 // pred_check_branch
          %176 = sbr.rel (%p174) target = $region28
        $region27: #{tpu_custom_call.1} parent=11 // pred_region
          _
        $region28: #{tpu_custom_call.1} parent=11 // pred_fallthru
          _
      $region12: #{tpu_custom_call.1} parent=5 // pred_fallthru
        _
      %p177 = scmp.lt.s32.totalorder %s14, 2
      // Predicated region
      $region29: #{tpu_custom_call.1} parent=5 // pred_check
        %p178 = pneg %p177
      $region30: #{tpu_custom_call.1} parent=5 // pred_check_branch
        %180 = sbr.rel (%p178) target = $region32
      $region31: #{tpu_custom_call.1} parent=5 // pred_region
        // Predicated region
        $region33: #{tpu_custom_call.1} parent=31 // pred_check
          %p181 = pneg %p34
        $region34: #{tpu_custom_call.1} parent=31 // pred_check_branch
          %183 = sbr.rel (%p181) target = $region36
        $region35: #{tpu_custom_call.1} parent=31 // pred_region
          %p184 = scmp.lt.s32.totalorder %s14, 1
          %s185 = scalar_select %p184, %s14, 1
          %s186 = smul.addr %s185, 64
          %s187 = smul.addr %s186, 8
          %s188 = scalar_lea.vmem %s0, %s187
        $region36: #{tpu_custom_call.1} parent=31 // pred_fallthru
          _
      $region32: #{tpu_custom_call.1} parent=5 // pred_fallthru
        _
      %p189 = scmp.le.s32.totalorder 1, %s14
      %p190 = scmp.lt.s32.totalorder %s14, 3
      %p191 = pnand %p189, %p190
      %p192 = pneg %p191
      // Predicated region
      $region37: #{tpu_custom_call.1} parent=5 // pred_check
        _
      $region38: #{tpu_custom_call.1} parent=5 // pred_check_branch
        %194 = sbr.rel (%p191) target = $region40
      $region39: #{tpu_custom_call.1} parent=5 // pred_region
        %s195 = ssub.s32 %s14, 1
        %p196 = scmp.lt.s32.totalorder %s19, 1
        %s197 = scalar_select %p196, %s19, 1
        %s198 = smul.addr %s197, 64
        %s199 = smul.addr %s198, 8
        %s200 = scalar_lea.vmem %s0, %s199
        %p201 = pneg %p40
        %p202 = pneg %p37
        %p203 = pneg %p61
        %p204 = pneg %p58
        %p205 = pneg %p82
        %p206 = pneg %p79
        %p207 = pneg %p103
        %p208 = pneg %p100
        %p209 = pneg %p124
        %p210 = pneg %p121
        %p211 = pneg %p150
        %p212 = pneg %p147
        %s213 = sand.u32 %s137, 1
        %s214 = scalar_lea.sflag [#allocation3], %s213
        %s215 = sand.u32 %s137, 1
        %s216 = smul.addr %s215, 512
        %s217 = scalar_lea.vmem [#allocation2], %s216
        %p218 = scmp.lt.s32.totalorder %s19, 1
        %s219 = scalar_select %p218, %s19, 1
        %s220 = smul.addr %s219, 64
        %s221 = smul.addr %s220, 8
        %s222 = scalar_lea.vmem %s0, %s221
        %v223 = vld [vmem:[%s222] sm:$0xff]
        %v224 = vld [vmem:[%s222 + $0x8] sm:$0xff]
        %v225 = vld [vmem:[%s222 + $0x10] sm:$0xff]
        %v226 = vld [vmem:[%s222 + $0x18] sm:$0xff]
        %v227 = vld [vmem:[%s222 + $0x20] sm:$0xff]
        %v228 = vld [vmem:[%s222 + $0x28] sm:$0xff]
        %v229 = vld [vmem:[%s222 + $0x30] sm:$0xff]
        %v230 = vld [vmem:[%s222 + $0x38] sm:$0xff]
        %v231 = vld [vmem:[%s222 + $0x40] sm:$0xff]
        %v232 = vld [vmem:[%s222 + $0x48] sm:$0xff]
        %v233 = vld [vmem:[%s222 + $0x50] sm:$0xff]
        %v234 = vld [vmem:[%s222 + $0x58] sm:$0xff]
        %v235 = vld [vmem:[%s222 + $0x60] sm:$0xff]
        %v236 = vld [vmem:[%s222 + $0x68] sm:$0xff]
        %v237 = vld [vmem:[%s222 + $0x70] sm:$0xff]
        %v238 = vld [vmem:[%s222 + $0x78] sm:$0xff]
        %v239 = vld [vmem:[%s222 + $0x80] sm:$0xff]
        %v240 = vld [vmem:[%s222 + $0x88] sm:$0xff]
        %v241 = vld [vmem:[%s222 + $0x90] sm:$0xff]
        %v242 = vld [vmem:[%s222 + $0x98] sm:$0xff]
        %v243 = vld [vmem:[%s222 + $0xa0] sm:$0xff]
        %v244 = vld [vmem:[%s222 + $0xa8] sm:$0xff]
        %v245 = vld [vmem:[%s222 + $0xb0] sm:$0xff]
        %v246 = vld [vmem:[%s222 + $0xb8] sm:$0xff]
        %v247 = vld [vmem:[%s222 + $0xc0] sm:$0xff]
        %v248 = vld [vmem:[%s222 + $0xc8] sm:$0xff]
        %v249 = vld [vmem:[%s222 + $0xd0] sm:$0xff]
        %v250 = vld [vmem:[%s222 + $0xd8] sm:$0xff]
        %v251 = vld [vmem:[%s222 + $0xe0] sm:$0xff]
        %v252 = vld [vmem:[%s222 + $0xe8] sm:$0xff]
        %v253 = vld [vmem:[%s222 + $0xf0] sm:$0xff]
        %v254 = vld [vmem:[%s222 + $0xf8] sm:$0xff]
        %v255 = vld [vmem:[%s222 + $0x100] sm:$0xff]
        %v256 = vld [vmem:[%s222 + $0x108] sm:$0xff]
        %v257 = vld [vmem:[%s222 + $0x110] sm:$0xff]
        %v258 = vld [vmem:[%s222 + $0x118] sm:$0xff]
        %v259 = vld [vmem:[%s222 + $0x120] sm:$0xff]
        %v260 = vld [vmem:[%s222 + $0x128] sm:$0xff]
        %v261 = vld [vmem:[%s222 + $0x130] sm:$0xff]
        %v262 = vld [vmem:[%s222 + $0x138] sm:$0xff]
        %v263 = vld [vmem:[%s222 + $0x140] sm:$0xff]
        %v264 = vld [vmem:[%s222 + $0x148] sm:$0xff]
        %v265 = vld [vmem:[%s222 + $0x150] sm:$0xff]
        %v266 = vld [vmem:[%s222 + $0x158] sm:$0xff]
        %v267 = vld [vmem:[%s222 + $0x160] sm:$0xff]
        %v268 = vld [vmem:[%s222 + $0x168] sm:$0xff]
        %v269 = vld [vmem:[%s222 + $0x170] sm:$0xff]
        %v270 = vld [vmem:[%s222 + $0x178] sm:$0xff]
        %v271 = vld [vmem:[%s222 + $0x180] sm:$0xff]
        %v272 = vld [vmem:[%s222 + $0x188] sm:$0xff]
        %v273 = vld [vmem:[%s222 + $0x190] sm:$0xff]
        %v274 = vld [vmem:[%s222 + $0x198] sm:$0xff]
        %v275 = vld [vmem:[%s222 + $0x1a0] sm:$0xff]
        %v276 = vld [vmem:[%s222 + $0x1a8] sm:$0xff]
        %v277 = vld [vmem:[%s222 + $0x1b0] sm:$0xff]
        %v278 = vld [vmem:[%s222 + $0x1b8] sm:$0xff]
        %v279 = vld [vmem:[%s222 + $0x1c0] sm:$0xff]
        %v280 = vld [vmem:[%s222 + $0x1c8] sm:$0xff]
        %v281 = vld [vmem:[%s222 + $0x1d0] sm:$0xff]
        %v282 = vld [vmem:[%s222 + $0x1d8] sm:$0xff]
        %v283 = vld [vmem:[%s222 + $0x1e0] sm:$0xff]
        %v284 = vld [vmem:[%s222 + $0x1e8] sm:$0xff]
        %v285 = vld [vmem:[%s222 + $0x1f0] sm:$0xff]
        %v286 = vld [vmem:[%s222 + $0x1f8] sm:$0xff]
        %v287 = vadd.f32 %v223, %v224
        %288 = vadd.xlane.f32.xlu0 %v287
        %v289 = vpop.xlane.xlu0 %288
        %v290 = vadd.f32 %v225, %v226
        %291 = vadd.xlane.f32.xlu0 %v290
        %v292 = vpop.xlane.xlu0 %291
        %v293 = vadd.f32 %v227, %v228
        %294 = vadd.xlane.f32.xlu0 %v293
        %v295 = vpop.xlane.xlu0 %294
        %v296 = vadd.f32 %v229, %v230
        %297 = vadd.xlane.f32.xlu0 %v296
        %v298 = vpop.xlane.xlu0 %297
        %v299 = vadd.f32 %v231, %v232
        %300 = vadd.xlane.f32.xlu0 %v299
        %v301 = vpop.xlane.xlu0 %300
        %v302 = vadd.f32 %v233, %v234
        %303 = vadd.xlane.f32.xlu0 %v302
        %v304 = vpop.xlane.xlu0 %303
        %v305 = vadd.f32 %v235, %v236
        %306 = vadd.xlane.f32.xlu0 %v305
        %v307 = vpop.xlane.xlu0 %306
        %v308 = vadd.f32 %v237, %v238
        %309 = vadd.xlane.f32.xlu0 %v308
        %v310 = vpop.xlane.xlu0 %309
        %v311 = vadd.f32 %v239, %v240
        %312 = vadd.xlane.f32.xlu0 %v311
        %v313 = vpop.xlane.xlu0 %312
        %v314 = vadd.f32 %v241, %v242
        %315 = vadd.xlane.f32.xlu0 %v314
        %v316 = vpop.xlane.xlu0 %315
        %v317 = vadd.f32 %v243, %v244
        %318 = vadd.xlane.f32.xlu0 %v317
        %v319 = vpop.xlane.xlu0 %318
        %v320 = vadd.f32 %v245, %v246
        %321 = vadd.xlane.f32.xlu0 %v320
        %v322 = vpop.xlane.xlu0 %321
        %v323 = vadd.f32 %v247, %v248
        %324 = vadd.xlane.f32.xlu0 %v323
        %v325 = vpop.xlane.xlu0 %324
        %v326 = vadd.f32 %v249, %v250
        %327 = vadd.xlane.f32.xlu0 %v326
        %v328 = vpop.xlane.xlu0 %327
        %v329 = vadd.f32 %v251, %v252
        %330 = vadd.xlane.f32.xlu0 %v329
        %v331 = vpop.xlane.xlu0 %330
        %v332 = vadd.f32 %v253, %v254
        %333 = vadd.xlane.f32.xlu0 %v332
        %v334 = vpop.xlane.xlu0 %333
        %v335 = vadd.f32 %v255, %v256
        %336 = vadd.xlane.f32.xlu0 %v335
        %v337 = vpop.xlane.xlu0 %336
        %v338 = vadd.f32 %v257, %v258
        %339 = vadd.xlane.f32.xlu0 %v338
        %v340 = vpop.xlane.xlu0 %339
        %v341 = vadd.f32 %v259, %v260
        %342 = vadd.xlane.f32.xlu0 %v341
        %v343 = vpop.xlane.xlu0 %342
        %v344 = vadd.f32 %v261, %v262
        %345 = vadd.xlane.f32.xlu0 %v344
        %v346 = vpop.xlane.xlu0 %345
        %v347 = vadd.f32 %v263, %v264
        %348 = vadd.xlane.f32.xlu0 %v347
        %v349 = vpop.xlane.xlu0 %348
        %v350 = vadd.f32 %v265, %v266
        %351 = vadd.xlane.f32.xlu0 %v350
        %v352 = vpop.xlane.xlu0 %351
        %v353 = vadd.f32 %v267, %v268
        %354 = vadd.xlane.f32.xlu0 %v353
        %v355 = vpop.xlane.xlu0 %354
        %v356 = vadd.f32 %v269, %v270
        %357 = vadd.xlane.f32.xlu0 %v356
        %v358 = vpop.xlane.xlu0 %357
        %v359 = vadd.f32 %v271, %v272
        %360 = vadd.xlane.f32.xlu0 %v359
        %v361 = vpop.xlane.xlu0 %360
        %v362 = vadd.f32 %v273, %v274
        %363 = vadd.xlane.f32.xlu0 %v362
        %v364 = vpop.xlane.xlu0 %363
        %v365 = vadd.f32 %v275, %v276
        %366 = vadd.xlane.f32.xlu0 %v365
        %v367 = vpop.xlane.xlu0 %366
        %v368 = vadd.f32 %v277, %v278
        %369 = vadd.xlane.f32.xlu0 %v368
        %v370 = vpop.xlane.xlu0 %369
        %v371 = vadd.f32 %v279, %v280
        %372 = vadd.xlane.f32.xlu0 %v371
        %v373 = vpop.xlane.xlu0 %372
        %v374 = vadd.f32 %v281, %v282
        %375 = vadd.xlane.f32.xlu0 %v374
        %v376 = vpop.xlane.xlu0 %375
        %v377 = vadd.f32 %v283, %v284
        %378 = vadd.xlane.f32.xlu0 %v377
        %v379 = vpop.xlane.xlu0 %378
        %v380 = vadd.f32 %v285, %v286
        %381 = vadd.xlane.f32.xlu0 %v380
        %v382 = vpop.xlane.xlu0 %381
        %v383 = vrcp.pop 256.0
        %v384 = vmul.f32 %v289, %v383
        %v385 = vmul.f32 %v292, %v383
        %v386 = vmul.f32 %v295, %v383
        %v387 = vmul.f32 %v298, %v383
        %v388 = vmul.f32 %v301, %v383
        %v389 = vmul.f32 %v304, %v383
        %v390 = vmul.f32 %v307, %v383
        %v391 = vmul.f32 %v310, %v383
        %v392 = vmul.f32 %v313, %v383
        %v393 = vmul.f32 %v316, %v383
        %v394 = vmul.f32 %v319, %v383
        %v395 = vmul.f32 %v322, %v383
        %v396 = vmul.f32 %v325, %v383
        %v397 = vmul.f32 %v328, %v383
        %v398 = vmul.f32 %v331, %v383
        %v399 = vmul.f32 %v334, %v383
        %v400 = vmul.f32 %v337, %v383
        %v401 = vmul.f32 %v340, %v383
        %v402 = vmul.f32 %v343, %v383
        %v403 = vmul.f32 %v346, %v383
        %v404 = vmul.f32 %v349, %v383
        %v405 = vmul.f32 %v352, %v383
        %v406 = vmul.f32 %v355, %v383
        %v407 = vmul.f32 %v358, %v383
        %v408 = vmul.f32 %v361, %v383
        %v409 = vmul.f32 %v364, %v383
        %v410 = vmul.f32 %v367, %v383
        %v411 = vmul.f32 %v370, %v383
        %v412 = vmul.f32 %v373, %v383
        %v413 = vmul.f32 %v376, %v383
        %v414 = vmul.f32 %v379, %v383
        %v415 = vmul.f32 %v382, %v383
        %v416 = vld [vmem:[%s1] sm:$0xff]
        %v417 = vld [vmem:[%s1 + $0x8] sm:$0xff]
        %v418 = vld [vmem:[%s1 + $0x10] sm:$0xff]
        %v419 = vld [vmem:[%s1 + $0x18] sm:$0xff]
        %v420 = vld [vmem:[%s1 + $0x20] sm:$0xff]
        %v421 = vld [vmem:[%s1 + $0x28] sm:$0xff]
        %v422 = vld [vmem:[%s1 + $0x30] sm:$0xff]
        %v423 = vld [vmem:[%s1 + $0x38] sm:$0xff]
        %v424 = vld [vmem:[%s1 + $0x40] sm:$0xff]
        %v425 = vld [vmem:[%s1 + $0x48] sm:$0xff]
        %v426 = vld [vmem:[%s1 + $0x50] sm:$0xff]
        %v427 = vld [vmem:[%s1 + $0x58] sm:$0xff]
        %v428 = vld [vmem:[%s1 + $0x60] sm:$0xff]
        %v429 = vld [vmem:[%s1 + $0x68] sm:$0xff]
        %v430 = vld [vmem:[%s1 + $0x70] sm:$0xff]
        %v431 = vld [vmem:[%s1 + $0x78] sm:$0xff]
        %v432 = vld [vmem:[%s1 + $0x80] sm:$0xff]
        %v433 = vld [vmem:[%s1 + $0x88] sm:$0xff]
        %v434 = vld [vmem:[%s1 + $0x90] sm:$0xff]
        %v435 = vld [vmem:[%s1 + $0x98] sm:$0xff]
        %v436 = vld [vmem:[%s1 + $0xa0] sm:$0xff]
        %v437 = vld [vmem:[%s1 + $0xa8] sm:$0xff]
        %v438 = vld [vmem:[%s1 + $0xb0] sm:$0xff]
        %v439 = vld [vmem:[%s1 + $0xb8] sm:$0xff]
        %v440 = vld [vmem:[%s1 + $0xc0] sm:$0xff]
        %v441 = vld [vmem:[%s1 + $0xc8] sm:$0xff]
        %v442 = vld [vmem:[%s1 + $0xd0] sm:$0xff]
        %v443 = vld [vmem:[%s1 + $0xd8] sm:$0xff]
        %v444 = vld [vmem:[%s1 + $0xe0] sm:$0xff]
        %v445 = vld [vmem:[%s1 + $0xe8] sm:$0xff]
        %v446 = vld [vmem:[%s1 + $0xf0] sm:$0xff]
        %v447 = vld [vmem:[%s1 + $0xf8] sm:$0xff]
        %v448 = vmul.f32 %v416, %v384
        %v449 = vmul.f32 %v417, %v385
        %v450 = vmul.f32 %v418, %v386
        %v451 = vmul.f32 %v419, %v387
        %v452 = vmul.f32 %v420, %v388
        %v453 = vmul.f32 %v421, %v389
        %v454 = vmul.f32 %v422, %v390
        %v455 = vmul.f32 %v423, %v391
        %v456 = vmul.f32 %v424, %v392
        %v457 = vmul.f32 %v425, %v393
        %v458 = vmul.f32 %v426, %v394
        %v459 = vmul.f32 %v427, %v395
        %v460 = vmul.f32 %v428, %v396
        %v461 = vmul.f32 %v429, %v397
        %v462 = vmul.f32 %v430, %v398
        %v463 = vmul.f32 %v431, %v399
        %v464 = vmul.f32 %v432, %v400
        %v465 = vmul.f32 %v433, %v401
        %v466 = vmul.f32 %v434, %v402
        %v467 = vmul.f32 %v435, %v403
        %v468 = vmul.f32 %v436, %v404
        %v469 = vmul.f32 %v437, %v405
        %v470 = vmul.f32 %v438, %v406
        %v471 = vmul.f32 %v439, %v407
        %v472 = vmul.f32 %v440, %v408
        %v473 = vmul.f32 %v441, %v409
        %v474 = vmul.f32 %v442, %v410
        %v475 = vmul.f32 %v443, %v411
        %v476 = vmul.f32 %v444, %v412
        %v477 = vmul.f32 %v445, %v413
        %v478 = vmul.f32 %v446, %v414
        %v479 = vmul.f32 %v447, %v415
        %vm480 = vcmask 523264
        %v481 = vsel %vm480, %v448, 0.0
        %v482 = vsel %vm480, %v449, 0.0
        %v483 = vadd.f32 %v481, %v482
        %v484 = vsel %vm480, %v450, 0.0
        %v485 = vadd.f32 %v483, %v484
        %v486 = vsel %vm480, %v451, 0.0
        %v487 = vadd.f32 %v485, %v486
        %v488 = vsel %vm480, %v452, 0.0
        %v489 = vadd.f32 %v487, %v488
        %v490 = vsel %vm480, %v453, 0.0
        %v491 = vadd.f32 %v489, %v490
        %v492 = vsel %vm480, %v454, 0.0
        %v493 = vadd.f32 %v491, %v492
        %v494 = vsel %vm480, %v455, 0.0
        %v495 = vadd.f32 %v493, %v494
        %v496 = vsel %vm480, %v456, 0.0
        %v497 = vadd.f32 %v495, %v496
        %v498 = vsel %vm480, %v457, 0.0
        %v499 = vadd.f32 %v497, %v498
        %v500 = vsel %vm480, %v458, 0.0
        %v501 = vadd.f32 %v499, %v500
        %v502 = vsel %vm480, %v459, 0.0
        %v503 = vadd.f32 %v501, %v502
        %v504 = vsel %vm480, %v460, 0.0
        %v505 = vadd.f32 %v503, %v504
        %v506 = vsel %vm480, %v461, 0.0
        %v507 = vadd.f32 %v505, %v506
        %v508 = vsel %vm480, %v462, 0.0
        %v509 = vadd.f32 %v507, %v508
        %v510 = vsel %vm480, %v463, 0.0
        %v511 = vadd.f32 %v509, %v510
        %v512 = vsel %vm480, %v464, 0.0
        %v513 = vadd.f32 %v511, %v512
        %v514 = vsel %vm480, %v465, 0.0
        %v515 = vadd.f32 %v513, %v514
        %v516 = vsel %vm480, %v466, 0.0
        %v517 = vadd.f32 %v515, %v516
        %v518 = vsel %vm480, %v467, 0.0
        %v519 = vadd.f32 %v517, %v518
        %v520 = vsel %vm480, %v468, 0.0
        %v521 = vadd.f32 %v519, %v520
        %v522 = vsel %vm480, %v469, 0.0
        %v523 = vadd.f32 %v521, %v522
        %v524 = vsel %vm480, %v470, 0.0
        %v525 = vadd.f32 %v523, %v524
        %v526 = vsel %vm480, %v471, 0.0
        %v527 = vadd.f32 %v525, %v526
        %v528 = vsel %vm480, %v472, 0.0
        %v529 = vadd.f32 %v527, %v528
        %v530 = vsel %vm480, %v473, 0.0
        %v531 = vadd.f32 %v529, %v530
        %v532 = vsel %vm480, %v474, 0.0
        %v533 = vadd.f32 %v531, %v532
        %v534 = vsel %vm480, %v475, 0.0
        %v535 = vadd.f32 %v533, %v534
        %v536 = vsel %vm480, %v476, 0.0
        %v537 = vadd.f32 %v535, %v536
        %v538 = vsel %vm480, %v477, 0.0
        %v539 = vadd.f32 %v537, %v538
        %v540 = vsel %vm480, %v478, 0.0
        %v541 = vadd.f32 %v539, %v540
        %v542 = vsel %vm480, %v479, 0.0
        %v543 = vadd.f32 %v541, %v542
        %v544 = vrot.slane %v543, 4
        %v545 = vadd.f32 %v543, %v544
        %v546 = vrot.slane %v545, 2
        %v547 = vadd.f32 %v545, %v546
        %v548 = vrot.slane %v547, 1
        %v549 = vadd.f32 %v547, %v548
        %v550 = vld [vmem:[%s2] sm:$0x1]
        %v551 = vadd.f32 %v549, %v550
        %v552 = vmax.f32 %v551, 0.0
        %v553 = vld [vmem:[%s3] sm:$0xff]
        %v554 = vld [vmem:[%s3 + $0x8] sm:$0xff]
        %v555 = vld [vmem:[%s3 + $0x10] sm:$0xff]
        %v556 = vld [vmem:[%s3 + $0x18] sm:$0xff]
        %v557 = vld [vmem:[%s3 + $0x20] sm:$0xff]
        %v558 = vld [vmem:[%s3 + $0x28] sm:$0xff]
        %v559 = vld [vmem:[%s3 + $0x30] sm:$0xff]
        %v560 = vld [vmem:[%s3 + $0x38] sm:$0xff]
        %v561 = vld [vmem:[%s3 + $0x40] sm:$0xff]
        %v562 = vld [vmem:[%s3 + $0x48] sm:$0xff]
        %v563 = vld [vmem:[%s3 + $0x50] sm:$0xff]
        %v564 = vld [vmem:[%s3 + $0x58] sm:$0xff]
        %v565 = vld [vmem:[%s3 + $0x60] sm:$0xff]
        %v566 = vld [vmem:[%s3 + $0x68] sm:$0xff]
        %v567 = vld [vmem:[%s3 + $0x70] sm:$0xff]
        %v568 = vld [vmem:[%s3 + $0x78] sm:$0xff]
        %v569 = vld [vmem:[%s3 + $0x80] sm:$0xff]
        %v570 = vld [vmem:[%s3 + $0x88] sm:$0xff]
        %v571 = vld [vmem:[%s3 + $0x90] sm:$0xff]
        %v572 = vld [vmem:[%s3 + $0x98] sm:$0xff]
        %v573 = vld [vmem:[%s3 + $0xa0] sm:$0xff]
        %v574 = vld [vmem:[%s3 + $0xa8] sm:$0xff]
        %v575 = vld [vmem:[%s3 + $0xb0] sm:$0xff]
        %v576 = vld [vmem:[%s3 + $0xb8] sm:$0xff]
        %v577 = vld [vmem:[%s3 + $0xc0] sm:$0xff]
        %v578 = vld [vmem:[%s3 + $0xc8] sm:$0xff]
        %v579 = vld [vmem:[%s3 + $0xd0] sm:$0xff]
        %v580 = vld [vmem:[%s3 + $0xd8] sm:$0xff]
        %v581 = vld [vmem:[%s3 + $0xe0] sm:$0xff]
        %v582 = vld [vmem:[%s3 + $0xe8] sm:$0xff]
        %v583 = vld [vmem:[%s3 + $0xf0] sm:$0xff]
        %v584 = vld [vmem:[%s3 + $0xf8] sm:$0xff]
        %v585 = vlaneseq
        %v586 = vshrl.u32 %v585, 7
        %v587 = vsub.s32 0, %v586
        %v588 = vrot.slane %v552, %v587
        %v589 = vmul.f32 %v553, %v588
        %v590 = vmul.f32 %v554, %v588
        %v591 = vmul.f32 %v555, %v588
        %v592 = vmul.f32 %v556, %v588
        %v593 = vmul.f32 %v557, %v588
        %v594 = vmul.f32 %v558, %v588
        %v595 = vmul.f32 %v559, %v588
        %v596 = vmul.f32 %v560, %v588
        %v597 = vmul.f32 %v561, %v588
        %v598 = vmul.f32 %v562, %v588
        %v599 = vmul.f32 %v563, %v588
        %v600 = vmul.f32 %v564, %v588
        %v601 = vmul.f32 %v565, %v588
        %v602 = vmul.f32 %v566, %v588
        %v603 = vmul.f32 %v567, %v588
        %v604 = vmul.f32 %v568, %v588
        %v605 = vmul.f32 %v569, %v588
        %v606 = vmul.f32 %v570, %v588
        %v607 = vmul.f32 %v571, %v588
        %v608 = vmul.f32 %v572, %v588
        %v609 = vmul.f32 %v573, %v588
        %v610 = vmul.f32 %v574, %v588
        %v611 = vmul.f32 %v575, %v588
        %v612 = vmul.f32 %v576, %v588
        %v613 = vmul.f32 %v577, %v588
        %v614 = vmul.f32 %v578, %v588
        %v615 = vmul.f32 %v579, %v588
        %v616 = vmul.f32 %v580, %v588
        %v617 = vmul.f32 %v581, %v588
        %v618 = vmul.f32 %v582, %v588
        %v619 = vmul.f32 %v583, %v588
        %v620 = vmul.f32 %v584, %v588
        %v621 = vsel %vm480, %v589, 0.0
        %622 = vadd.xlane.f32.xlu0 %v621
        %v623 = vpop.xlane.xlu0 %622
        %v624 = vsel %vm480, %v590, 0.0
        %625 = vadd.xlane.f32.xlu0 %v624
        %v626 = vpop.xlane.xlu0 %625
        %v627 = vsel %vm480, %v591, 0.0
        %628 = vadd.xlane.f32.xlu0 %v627
        %v629 = vpop.xlane.xlu0 %628
        %v630 = vsel %vm480, %v592, 0.0
        %631 = vadd.xlane.f32.xlu0 %v630
        %v632 = vpop.xlane.xlu0 %631
        %v633 = vsel %vm480, %v593, 0.0
        %634 = vadd.xlane.f32.xlu0 %v633
        %v635 = vpop.xlane.xlu0 %634
        %v636 = vsel %vm480, %v594, 0.0
        %637 = vadd.xlane.f32.xlu0 %v636
        %v638 = vpop.xlane.xlu0 %637
        %v639 = vsel %vm480, %v595, 0.0
        %640 = vadd.xlane.f32.xlu0 %v639
        %v641 = vpop.xlane.xlu0 %640
        %v642 = vsel %vm480, %v596, 0.0
        %643 = vadd.xlane.f32.xlu0 %v642
        %v644 = vpop.xlane.xlu0 %643
        %v645 = vsel %vm480, %v597, 0.0
        %646 = vadd.xlane.f32.xlu0 %v645
        %v647 = vpop.xlane.xlu0 %646
        %v648 = vsel %vm480, %v598, 0.0
        %649 = vadd.xlane.f32.xlu0 %v648
        %v650 = vpop.xlane.xlu0 %649
        %v651 = vsel %vm480, %v599, 0.0
        %652 = vadd.xlane.f32.xlu0 %v651
        %v653 = vpop.xlane.xlu0 %652
        %v654 = vsel %vm480, %v600, 0.0
        %655 = vadd.xlane.f32.xlu0 %v654
        %v656 = vpop.xlane.xlu0 %655
        %v657 = vsel %vm480, %v601, 0.0
        %658 = vadd.xlane.f32.xlu0 %v657
        %v659 = vpop.xlane.xlu0 %658
        %v660 = vsel %vm480, %v602, 0.0
        %661 = vadd.xlane.f32.xlu0 %v660
        %v662 = vpop.xlane.xlu0 %661
        %v663 = vsel %vm480, %v603, 0.0
        %664 = vadd.xlane.f32.xlu0 %v663
        %v665 = vpop.xlane.xlu0 %664
        %v666 = vsel %vm480, %v604, 0.0
        %667 = vadd.xlane.f32.xlu0 %v666
        %v668 = vpop.xlane.xlu0 %667
        %v669 = vsel %vm480, %v605, 0.0
        %670 = vadd.xlane.f32.xlu0 %v669
        %v671 = vpop.xlane.xlu0 %670
        %v672 = vsel %vm480, %v606, 0.0
        %673 = vadd.xlane.f32.xlu0 %v672
        %v674 = vpop.xlane.xlu0 %673
        %v675 = vsel %vm480, %v607, 0.0
        %676 = vadd.xlane.f32.xlu0 %v675
        %v677 = vpop.xlane.xlu0 %676
        %v678 = vsel %vm480, %v608, 0.0
        %679 = vadd.xlane.f32.xlu0 %v678
        %v680 = vpop.xlane.xlu0 %679
        %v681 = vsel %vm480, %v609, 0.0
        %682 = vadd.xlane.f32.xlu0 %v681
        %v683 = vpop.xlane.xlu0 %682
        %v684 = vsel %vm480, %v610, 0.0
        %685 = vadd.xlane.f32.xlu0 %v684
        %v686 = vpop.xlane.xlu0 %685
        %v687 = vsel %vm480, %v611, 0.0
        %688 = vadd.xlane.f32.xlu0 %v687
        %v689 = vpop.xlane.xlu0 %688
        %v690 = vsel %vm480, %v612, 0.0
        %691 = vadd.xlane.f32.xlu0 %v690
        %v692 = vpop.xlane.xlu0 %691
        %v693 = vsel %vm480, %v613, 0.0
        %694 = vadd.xlane.f32.xlu0 %v693
        %v695 = vpop.xlane.xlu0 %694
        %v696 = vsel %vm480, %v614, 0.0
        %697 = vadd.xlane.f32.xlu0 %v696
        %v698 = vpop.xlane.xlu0 %697
        %v699 = vsel %vm480, %v615, 0.0
        %700 = vadd.xlane.f32.xlu0 %v699
        %v701 = vpop.xlane.xlu0 %700
        %v702 = vsel %vm480, %v616, 0.0
        %703 = vadd.xlane.f32.xlu0 %v702
        %v704 = vpop.xlane.xlu0 %703
        %v705 = vsel %vm480, %v617, 0.0
        %706 = vadd.xlane.f32.xlu0 %v705
        %v707 = vpop.xlane.xlu0 %706
        %v708 = vsel %vm480, %v618, 0.0
        %709 = vadd.xlane.f32.xlu0 %v708
        %v710 = vpop.xlane.xlu0 %709
        %v711 = vsel %vm480, %v619, 0.0
        %712 = vadd.xlane.f32.xlu0 %v711
        %v713 = vpop.xlane.xlu0 %712
        %v714 = vsel %vm480, %v620, 0.0
        %715 = vadd.xlane.f32.xlu0 %v714
        %v716 = vpop.xlane.xlu0 %715
        %v717 = vld [vmem:[%s4] sm:$0xff]
        %v718 = vld [vmem:[%s4 + $0x8] sm:$0xff]
        %v719 = vld [vmem:[%s4 + $0x10] sm:$0xff]
        %v720 = vld [vmem:[%s4 + $0x18] sm:$0xff]
        %v721 = vld [vmem:[%s4 + $0x20] sm:$0xff]
        %v722 = vld [vmem:[%s4 + $0x28] sm:$0xff]
        %v723 = vld [vmem:[%s4 + $0x30] sm:$0xff]
        %v724 = vld [vmem:[%s4 + $0x38] sm:$0xff]
        %v725 = vld [vmem:[%s4 + $0x40] sm:$0xff]
        %v726 = vld [vmem:[%s4 + $0x48] sm:$0xff]
        %v727 = vld [vmem:[%s4 + $0x50] sm:$0xff]
        %v728 = vld [vmem:[%s4 + $0x58] sm:$0xff]
        %v729 = vld [vmem:[%s4 + $0x60] sm:$0xff]
        %v730 = vld [vmem:[%s4 + $0x68] sm:$0xff]
        %v731 = vld [vmem:[%s4 + $0x70] sm:$0xff]
        %v732 = vld [vmem:[%s4 + $0x78] sm:$0xff]
        %v733 = vld [vmem:[%s4 + $0x80] sm:$0xff]
        %v734 = vld [vmem:[%s4 + $0x88] sm:$0xff]
        %v735 = vld [vmem:[%s4 + $0x90] sm:$0xff]
        %v736 = vld [vmem:[%s4 + $0x98] sm:$0xff]
        %v737 = vld [vmem:[%s4 + $0xa0] sm:$0xff]
        %v738 = vld [vmem:[%s4 + $0xa8] sm:$0xff]
        %v739 = vld [vmem:[%s4 + $0xb0] sm:$0xff]
        %v740 = vld [vmem:[%s4 + $0xb8] sm:$0xff]
        %v741 = vld [vmem:[%s4 + $0xc0] sm:$0xff]
        %v742 = vld [vmem:[%s4 + $0xc8] sm:$0xff]
        %v743 = vld [vmem:[%s4 + $0xd0] sm:$0xff]
        %v744 = vld [vmem:[%s4 + $0xd8] sm:$0xff]
        %v745 = vld [vmem:[%s4 + $0xe0] sm:$0xff]
        %v746 = vld [vmem:[%s4 + $0xe8] sm:$0xff]
        %v747 = vld [vmem:[%s4 + $0xf0] sm:$0xff]
        %v748 = vld [vmem:[%s4 + $0xf8] sm:$0xff]
        %v749 = vadd.f32 %v623, %v717
        %v750 = vadd.f32 %v626, %v718
        %v751 = vadd.f32 %v629, %v719
        %v752 = vadd.f32 %v632, %v720
        %v753 = vadd.f32 %v635, %v721
        %v754 = vadd.f32 %v638, %v722
        %v755 = vadd.f32 %v641, %v723
        %v756 = vadd.f32 %v644, %v724
        %v757 = vadd.f32 %v647, %v725
        %v758 = vadd.f32 %v650, %v726
        %v759 = vadd.f32 %v653, %v727
        %v760 = vadd.f32 %v656, %v728
        %v761 = vadd.f32 %v659, %v729
        %v762 = vadd.f32 %v662, %v730
        %v763 = vadd.f32 %v665, %v731
        %v764 = vadd.f32 %v668, %v732
        %v765 = vadd.f32 %v671, %v733
        %v766 = vadd.f32 %v674, %v734
        %v767 = vadd.f32 %v677, %v735
        %v768 = vadd.f32 %v680, %v736
        %v769 = vadd.f32 %v683, %v737
        %v770 = vadd.f32 %v686, %v738
        %v771 = vadd.f32 %v689, %v739
        %v772 = vadd.f32 %v692, %v740
        %v773 = vadd.f32 %v695, %v741
        %v774 = vadd.f32 %v698, %v742
        %v775 = vadd.f32 %v701, %v743
        %v776 = vadd.f32 %v704, %v744
        %v777 = vadd.f32 %v707, %v745
        %v778 = vadd.f32 %v710, %v746
        %v779 = vadd.f32 %v713, %v747
        %v780 = vadd.f32 %v716, %v748
        %v781 = vadd.f32 %v749, 3.0
        %v782 = vadd.f32 %v750, 3.0
        %v783 = vadd.f32 %v751, 3.0
        %v784 = vadd.f32 %v752, 3.0
        %v785 = vadd.f32 %v753, 3.0
        %v786 = vadd.f32 %v754, 3.0
        %v787 = vadd.f32 %v755, 3.0
        %v788 = vadd.f32 %v756, 3.0
        %v789 = vadd.f32 %v757, 3.0
        %v790 = vadd.f32 %v758, 3.0
        %v791 = vadd.f32 %v759, 3.0
        %v792 = vadd.f32 %v760, 3.0
        %v793 = vadd.f32 %v761, 3.0
        %v794 = vadd.f32 %v762, 3.0
        %v795 = vadd.f32 %v763, 3.0
        %v796 = vadd.f32 %v764, 3.0
        %v797 = vadd.f32 %v765, 3.0
        %v798 = vadd.f32 %v766, 3.0
        %v799 = vadd.f32 %v767, 3.0
        %v800 = vadd.f32 %v768, 3.0
        %v801 = vadd.f32 %v769, 3.0
        %v802 = vadd.f32 %v770, 3.0
        %v803 = vadd.f32 %v771, 3.0
        %v804 = vadd.f32 %v772, 3.0
        %v805 = vadd.f32 %v773, 3.0
        %v806 = vadd.f32 %v774, 3.0
        %v807 = vadd.f32 %v775, 3.0
        %v808 = vadd.f32 %v776, 3.0
        %v809 = vadd.f32 %v777, 3.0
        %v810 = vadd.f32 %v778, 3.0
        %v811 = vadd.f32 %v779, 3.0
        %v812 = vadd.f32 %v780, 3.0
        %v813 = vmax.f32 %v781, 0.0
        %v814 = vmax.f32 %v782, 0.0
        %v815 = vmax.f32 %v783, 0.0
        %v816 = vmax.f32 %v784, 0.0
        %v817 = vmax.f32 %v785, 0.0
        %v818 = vmax.f32 %v786, 0.0
        %v819 = vmax.f32 %v787, 0.0
        %v820 = vmax.f32 %v788, 0.0
        %v821 = vmax.f32 %v789, 0.0
        %v822 = vmax.f32 %v790, 0.0
        %v823 = vmax.f32 %v791, 0.0
        %v824 = vmax.f32 %v792, 0.0
        %v825 = vmax.f32 %v793, 0.0
        %v826 = vmax.f32 %v794, 0.0
        %v827 = vmax.f32 %v795, 0.0
        %v828 = vmax.f32 %v796, 0.0
        %v829 = vmax.f32 %v797, 0.0
        %v830 = vmax.f32 %v798, 0.0
        %v831 = vmax.f32 %v799, 0.0
        %v832 = vmax.f32 %v800, 0.0
        %v833 = vmax.f32 %v801, 0.0
        %v834 = vmax.f32 %v802, 0.0
        %v835 = vmax.f32 %v803, 0.0
        %v836 = vmax.f32 %v804, 0.0
        %v837 = vmax.f32 %v805, 0.0
        %v838 = vmax.f32 %v806, 0.0
        %v839 = vmax.f32 %v807, 0.0
        %v840 = vmax.f32 %v808, 0.0
        %v841 = vmax.f32 %v809, 0.0
        %v842 = vmax.f32 %v810, 0.0
        %v843 = vmax.f32 %v811, 0.0
        %v844 = vmax.f32 %v812, 0.0
        %v845 = vmin.f32 %v813, 6.0
        %v846 = vmin.f32 %v814, 6.0
        %v847 = vmin.f32 %v815, 6.0
        %v848 = vmin.f32 %v816, 6.0
        %v849 = vmin.f32 %v817, 6.0
        %v850 = vmin.f32 %v818, 6.0
        %v851 = vmin.f32 %v819, 6.0
        %v852 = vmin.f32 %v820, 6.0
        %v853 = vmin.f32 %v821, 6.0
        %v854 = vmin.f32 %v822, 6.0
        %v855 = vmin.f32 %v823, 6.0
        %v856 = vmin.f32 %v824, 6.0
        %v857 = vmin.f32 %v825, 6.0
        %v858 = vmin.f32 %v826, 6.0
        %v859 = vmin.f32 %v827, 6.0
        %v860 = vmin.f32 %v828, 6.0
        %v861 = vmin.f32 %v829, 6.0
        %v862 = vmin.f32 %v830, 6.0
        %v863 = vmin.f32 %v831, 6.0
        %v864 = vmin.f32 %v832, 6.0
        %v865 = vmin.f32 %v833, 6.0
        %v866 = vmin.f32 %v834, 6.0
        %v867 = vmin.f32 %v835, 6.0
        %v868 = vmin.f32 %v836, 6.0
        %v869 = vmin.f32 %v837, 6.0
        %v870 = vmin.f32 %v838, 6.0
        %v871 = vmin.f32 %v839, 6.0
        %v872 = vmin.f32 %v840, 6.0
        %v873 = vmin.f32 %v841, 6.0
        %v874 = vmin.f32 %v842, 6.0
        %v875 = vmin.f32 %v843, 6.0
        %v876 = vmin.f32 %v844, 6.0
        %v877 = vmul.f32 %v845, 0.16666667
        %v878 = vmul.f32 %v846, 0.16666667
        %v879 = vmul.f32 %v847, 0.16666667
        %v880 = vmul.f32 %v848, 0.16666667
        %v881 = vmul.f32 %v849, 0.16666667
        %v882 = vmul.f32 %v850, 0.16666667
        %v883 = vmul.f32 %v851, 0.16666667
        %v884 = vmul.f32 %v852, 0.16666667
        %v885 = vmul.f32 %v853, 0.16666667
        %v886 = vmul.f32 %v854, 0.16666667
        %v887 = vmul.f32 %v855, 0.16666667
        %v888 = vmul.f32 %v856, 0.16666667
        %v889 = vmul.f32 %v857, 0.16666667
        %v890 = vmul.f32 %v858, 0.16666667
        %v891 = vmul.f32 %v859, 0.16666667
        %v892 = vmul.f32 %v860, 0.16666667
        %v893 = vmul.f32 %v861, 0.16666667
        %v894 = vmul.f32 %v862, 0.16666667
        %v895 = vmul.f32 %v863, 0.16666667
        %v896 = vmul.f32 %v864, 0.16666667
        %v897 = vmul.f32 %v865, 0.16666667
        %v898 = vmul.f32 %v866, 0.16666667
        %v899 = vmul.f32 %v867, 0.16666667
        %v900 = vmul.f32 %v868, 0.16666667
        %v901 = vmul.f32 %v869, 0.16666667
        %v902 = vmul.f32 %v870, 0.16666667
        %v903 = vmul.f32 %v871, 0.16666667
        %v904 = vmul.f32 %v872, 0.16666667
        %v905 = vmul.f32 %v873, 0.16666667
        %v906 = vmul.f32 %v874, 0.16666667
        %v907 = vmul.f32 %v875, 0.16666667
        %v908 = vmul.f32 %v876, 0.16666667
        %910 = vset.pattern.permute.xlu0 0
        %911 = vperm.xlu0 %910, %v877
        %v912 = vpop.permute.xlu0 %911
        %915 = vset.pattern.permute.xlu0 0
        %916 = vperm.xlu0 %915, %v878
        %v917 = vpop.permute.xlu0 %916
        %920 = vset.pattern.permute.xlu0 0
        %921 = vperm.xlu0 %920, %v879
        %v922 = vpop.permute.xlu0 %921
        %925 = vset.pattern.permute.xlu0 0
        %926 = vperm.xlu0 %925, %v880
        %v927 = vpop.permute.xlu0 %926
        %930 = vset.pattern.permute.xlu0 0
        %931 = vperm.xlu0 %930, %v881
        %v932 = vpop.permute.xlu0 %931
        %935 = vset.pattern.permute.xlu0 0
        %936 = vperm.xlu0 %935, %v882
        %v937 = vpop.permute.xlu0 %936
        %940 = vset.pattern.permute.xlu0 0
        %941 = vperm.xlu0 %940, %v883
        %v942 = vpop.permute.xlu0 %941
        %945 = vset.pattern.permute.xlu0 0
        %946 = vperm.xlu0 %945, %v884
        %v947 = vpop.permute.xlu0 %946
        %950 = vset.pattern.permute.xlu0 0
        %951 = vperm.xlu0 %950, %v885
        %v952 = vpop.permute.xlu0 %951
        %955 = vset.pattern.permute.xlu0 0
        %956 = vperm.xlu0 %955, %v886
        %v957 = vpop.permute.xlu0 %956
        %960 = vset.pattern.permute.xlu0 0
        %961 = vperm.xlu0 %960, %v887
        %v962 = vpop.permute.xlu0 %961
        %965 = vset.pattern.permute.xlu0 0
        %966 = vperm.xlu0 %965, %v888
        %v967 = vpop.permute.xlu0 %966
        %970 = vset.pattern.permute.xlu0 0
        %971 = vperm.xlu0 %970, %v889
        %v972 = vpop.permute.xlu0 %971
        %975 = vset.pattern.permute.xlu0 0
        %976 = vperm.xlu0 %975, %v890
        %v977 = vpop.permute.xlu0 %976
        %980 = vset.pattern.permute.xlu0 0
        %981 = vperm.xlu0 %980, %v891
        %v982 = vpop.permute.xlu0 %981
        %985 = vset.pattern.permute.xlu0 0
        %986 = vperm.xlu0 %985, %v892
        %v987 = vpop.permute.xlu0 %986
        %990 = vset.pattern.permute.xlu0 0
        %991 = vperm.xlu0 %990, %v893
        %v992 = vpop.permute.xlu0 %991
        %995 = vset.pattern.permute.xlu0 0
        %996 = vperm.xlu0 %995, %v894
        %v997 = vpop.permute.xlu0 %996
        %1000 = vset.pattern.permute.xlu0 0
        %1001 = vperm.xlu0 %1000, %v895
        %v1002 = vpop.permute.xlu0 %1001
        %1005 = vset.pattern.permute.xlu0 0
        %1006 = vperm.xlu0 %1005, %v896
        %v1007 = vpop.permute.xlu0 %1006
        %1010 = vset.pattern.permute.xlu0 0
        %1011 = vperm.xlu0 %1010, %v897
        %v1012 = vpop.permute.xlu0 %1011
        %1015 = vset.pattern.permute.xlu0 0
        %1016 = vperm.xlu0 %1015, %v898
        %v1017 = vpop.permute.xlu0 %1016
        %1020 = vset.pattern.permute.xlu0 0
        %1021 = vperm.xlu0 %1020, %v899
        %v1022 = vpop.permute.xlu0 %1021
        %1025 = vset.pattern.permute.xlu0 0
        %1026 = vperm.xlu0 %1025, %v900
        %v1027 = vpop.permute.xlu0 %1026
        %1030 = vset.pattern.permute.xlu0 0
        %1031 = vperm.xlu0 %1030, %v901
        %v1032 = vpop.permute.xlu0 %1031
        %1035 = vset.pattern.permute.xlu0 0
        %1036 = vperm.xlu0 %1035, %v902
        %v1037 = vpop.permute.xlu0 %1036
        %1040 = vset.pattern.permute.xlu0 0
        %1041 = vperm.xlu0 %1040, %v903
        %v1042 = vpop.permute.xlu0 %1041
        %1045 = vset.pattern.permute.xlu0 0
        %1046 = vperm.xlu0 %1045, %v904
        %v1047 = vpop.permute.xlu0 %1046
        %1050 = vset.pattern.permute.xlu0 0
        %1051 = vperm.xlu0 %1050, %v905
        %v1052 = vpop.permute.xlu0 %1051
        %1055 = vset.pattern.permute.xlu0 0
        %1056 = vperm.xlu0 %1055, %v906
        %v1057 = vpop.permute.xlu0 %1056
        %1060 = vset.pattern.permute.xlu0 0
        %1061 = vperm.xlu0 %1060, %v907
        %v1062 = vpop.permute.xlu0 %1061
        %1065 = vset.pattern.permute.xlu0 0
        %1066 = vperm.xlu0 %1065, %v908
        %v1067 = vpop.permute.xlu0 %1066
        %v1069 = vmul.f32 %v223, %v912
        %v1070 = vmul.f32 %v224, %v912
        %v1071 = vmul.f32 %v225, %v917
        %v1072 = vmul.f32 %v226, %v917
        %v1073 = vmul.f32 %v227, %v922
        %v1074 = vmul.f32 %v228, %v922
        %v1075 = vmul.f32 %v229, %v927
        %v1076 = vmul.f32 %v230, %v927
        %v1077 = vmul.f32 %v231, %v932
        %v1078 = vmul.f32 %v232, %v932
        %v1079 = vmul.f32 %v233, %v937
        %v1080 = vmul.f32 %v234, %v937
        %v1081 = vmul.f32 %v235, %v942
        %v1082 = vmul.f32 %v236, %v942
        %v1083 = vmul.f32 %v237, %v947
        %v1084 = vmul.f32 %v238, %v947
        %v1085 = vmul.f32 %v239, %v952
        %v1086 = vmul.f32 %v240, %v952
        %v1087 = vmul.f32 %v241, %v957
        %v1088 = vmul.f32 %v242, %v957
        %v1089 = vmul.f32 %v243, %v962
        %v1090 = vmul.f32 %v244, %v962
        %v1091 = vmul.f32 %v245, %v967
        %v1092 = vmul.f32 %v246, %v967
        %v1093 = vmul.f32 %v247, %v972
        %v1094 = vmul.f32 %v248, %v972
        %v1095 = vmul.f32 %v249, %v977
        %v1096 = vmul.f32 %v250, %v977
        %v1097 = vmul.f32 %v251, %v982
        %v1098 = vmul.f32 %v252, %v982
        %v1099 = vmul.f32 %v253, %v987
        %v1100 = vmul.f32 %v254, %v987
        %v1101 = vmul.f32 %v255, %v992
        %v1102 = vmul.f32 %v256, %v992
        %v1103 = vmul.f32 %v257, %v997
        %v1104 = vmul.f32 %v258, %v997
        %v1105 = vmul.f32 %v259, %v1002
        %v1106 = vmul.f32 %v260, %v1002
        %v1107 = vmul.f32 %v261, %v1007
        %v1108 = vmul.f32 %v262, %v1007
        %v1109 = vmul.f32 %v263, %v1012
        %v1110 = vmul.f32 %v264, %v1012
        %v1111 = vmul.f32 %v265, %v1017
        %v1112 = vmul.f32 %v266, %v1017
        %v1113 = vmul.f32 %v267, %v1022
        %v1114 = vmul.f32 %v268, %v1022
        %v1115 = vmul.f32 %v269, %v1027
        %v1116 = vmul.f32 %v270, %v1027
        %v1117 = vmul.f32 %v271, %v1032
        %v1118 = vmul.f32 %v272, %v1032
        %v1119 = vmul.f32 %v273, %v1037
        %v1120 = vmul.f32 %v274, %v1037
        %v1121 = vmul.f32 %v275, %v1042
        %v1122 = vmul.f32 %v276, %v1042
        %v1123 = vmul.f32 %v277, %v1047
        %v1124 = vmul.f32 %v278, %v1047
        %v1125 = vmul.f32 %v279, %v1052
        %v1126 = vmul.f32 %v280, %v1052
        %v1127 = vmul.f32 %v281, %v1057
        %v1128 = vmul.f32 %v282, %v1057
        %v1129 = vmul.f32 %v283, %v1062
        %v1130 = vmul.f32 %v284, %v1062
        %v1131 = vmul.f32 %v285, %v1067
        %v1132 = vmul.f32 %v286, %v1067
        %1133 = vst [vmem:[%s217] sm:$0xff] %v1069
        %1134 = vst [vmem:[%s217 + $0x8] sm:$0xff] %v1070
        %1135 = vst [vmem:[%s217 + $0x10] sm:$0xff] %v1071
        %1136 = vst [vmem:[%s217 + $0x18] sm:$0xff] %v1072
        %1137 = vst [vmem:[%s217 + $0x20] sm:$0xff] %v1073
        %1138 = vst [vmem:[%s217 + $0x28] sm:$0xff] %v1074
        %1139 = vst [vmem:[%s217 + $0x30] sm:$0xff] %v1075
        %1140 = vst [vmem:[%s217 + $0x38] sm:$0xff] %v1076
        %1141 = vst [vmem:[%s217 + $0x40] sm:$0xff] %v1077
        %1142 = vst [vmem:[%s217 + $0x48] sm:$0xff] %v1078
        %1143 = vst [vmem:[%s217 + $0x50] sm:$0xff] %v1079
        %1144 = vst [vmem:[%s217 + $0x58] sm:$0xff] %v1080
        %1145 = vst [vmem:[%s217 + $0x60] sm:$0xff] %v1081
        %1146 = vst [vmem:[%s217 + $0x68] sm:$0xff] %v1082
        %1147 = vst [vmem:[%s217 + $0x70] sm:$0xff] %v1083
        %1148 = vst [vmem:[%s217 + $0x78] sm:$0xff] %v1084
        %1149 = vst [vmem:[%s217 + $0x80] sm:$0xff] %v1085
        %1150 = vst [vmem:[%s217 + $0x88] sm:$0xff] %v1086
        %1151 = vst [vmem:[%s217 + $0x90] sm:$0xff] %v1087
        %1152 = vst [vmem:[%s217 + $0x98] sm:$0xff] %v1088
        %1153 = vst [vmem:[%s217 + $0xa0] sm:$0xff] %v1089
        %1154 = vst [vmem:[%s217 + $0xa8] sm:$0xff] %v1090
        %1155 = vst [vmem:[%s217 + $0xb0] sm:$0xff] %v1091
        %1156 = vst [vmem:[%s217 + $0xb8] sm:$0xff] %v1092
        %1157 = vst [vmem:[%s217 + $0xc0] sm:$0xff] %v1093
        %1158 = vst [vmem:[%s217 + $0xc8] sm:$0xff] %v1094
        %1159 = vst [vmem:[%s217 + $0xd0] sm:$0xff] %v1095
        %1160 = vst [vmem:[%s217 + $0xd8] sm:$0xff] %v1096
        %1161 = vst [vmem:[%s217 + $0xe0] sm:$0xff] %v1097
        %1162 = vst [vmem:[%s217 + $0xe8] sm:$0xff] %v1098
        %1163 = vst [vmem:[%s217 + $0xf0] sm:$0xff] %v1099
        %1164 = vst [vmem:[%s217 + $0xf8] sm:$0xff] %v1100
        %1165 = vst [vmem:[%s217 + $0x100] sm:$0xff] %v1101
        %1166 = vst [vmem:[%s217 + $0x108] sm:$0xff] %v1102
        %1167 = vst [vmem:[%s217 + $0x110] sm:$0xff] %v1103
        %1168 = vst [vmem:[%s217 + $0x118] sm:$0xff] %v1104
        %1169 = vst [vmem:[%s217 + $0x120] sm:$0xff] %v1105
        %1170 = vst [vmem:[%s217 + $0x128] sm:$0xff] %v1106
        %1171 = vst [vmem:[%s217 + $0x130] sm:$0xff] %v1107
        %1172 = vst [vmem:[%s217 + $0x138] sm:$0xff] %v1108
        %1173 = vst [vmem:[%s217 + $0x140] sm:$0xff] %v1109
        %1174 = vst [vmem:[%s217 + $0x148] sm:$0xff] %v1110
        %1175 = vst [vmem:[%s217 + $0x150] sm:$0xff] %v1111
        %1176 = vst [vmem:[%s217 + $0x158] sm:$0xff] %v1112
        %1177 = vst [vmem:[%s217 + $0x160] sm:$0xff] %v1113
        %1178 = vst [vmem:[%s217 + $0x168] sm:$0xff] %v1114
        %1179 = vst [vmem:[%s217 + $0x170] sm:$0xff] %v1115
        %1180 = vst [vmem:[%s217 + $0x178] sm:$0xff] %v1116
        %1181 = vst [vmem:[%s217 + $0x180] sm:$0xff] %v1117
        %1182 = vst [vmem:[%s217 + $0x188] sm:$0xff] %v1118
        %1183 = vst [vmem:[%s217 + $0x190] sm:$0xff] %v1119
        %1184 = vst [vmem:[%s217 + $0x198] sm:$0xff] %v1120
        %1185 = vst [vmem:[%s217 + $0x1a0] sm:$0xff] %v1121
        %1186 = vst [vmem:[%s217 + $0x1a8] sm:$0xff] %v1122
        %1187 = vst [vmem:[%s217 + $0x1b0] sm:$0xff] %v1123
        %1188 = vst [vmem:[%s217 + $0x1b8] sm:$0xff] %v1124
        %1189 = vst [vmem:[%s217 + $0x1c0] sm:$0xff] %v1125
        %1190 = vst [vmem:[%s217 + $0x1c8] sm:$0xff] %v1126
        %1191 = vst [vmem:[%s217 + $0x1d0] sm:$0xff] %v1127
        %1192 = vst [vmem:[%s217 + $0x1d8] sm:$0xff] %v1128
        %1193 = vst [vmem:[%s217 + $0x1e0] sm:$0xff] %v1129
        %1194 = vst [vmem:[%s217 + $0x1e8] sm:$0xff] %v1130
        %1195 = vst [vmem:[%s217 + $0x1f0] sm:$0xff] %v1131
        %1196 = vst [vmem:[%s217 + $0x1f8] sm:$0xff] %v1132
        %s1197 = sand.u32 %s137, 1
        %s1198 = scalar_lea.sflag [#allocation3], %s1197
        %s1199 = sand.u32 %s137, 1
        %s1200 = smul.addr %s1199, 512
        %s1201 = scalar_lea.vmem [#allocation2], %s1200
        // Predicated region
        $region41: #{tpu_custom_call.1} parent=39 // pred_check
          %p1202 = pneg %p147
        $region42: #{tpu_custom_call.1} parent=39 // pred_check_branch
          %1204 = sbr.rel (%p1202) target = $region44
        $region43: #{tpu_custom_call.1} parent=39 // pred_region
          %s1206 = ssub.s32 8192, 8192
          %1207 = vsyncadd %s1198, %s1206
          %s1208 = smul.addr %s19, 64
          %s1209 = smul.addr %s1208, 128
          %s1210 = scalar_lea.hbm %s5, %s1209
          %s1211 = sshll.u32 %s1201, 4
          %s1212 = int_to_ptr.vmem [resolvable:$true] %s1211
          %1217 = dma.vmem_to_hbm [thread:$0]  %s1212, 8192, %s1210, %s1198, 256, 256, 16
        $region44: #{tpu_custom_call.1} parent=39 // pred_fallthru
          _
      $region40: #{tpu_custom_call.1} parent=5 // pred_fallthru
        _
      %p1218 = scmp.le.s32.totalorder 2, %s14
      // Predicated region
      $region45: #{tpu_custom_call.1} parent=5 // pred_check
        %p1219 = pneg %p1218
      $region46: #{tpu_custom_call.1} parent=5 // pred_check_branch
        %1221 = sbr.rel (%p1219) target = $region48
      $region47: #{tpu_custom_call.1} parent=5 // pred_region
        %s1222 = ssub.s32 %s14, 2
        // Predicated region
        $region49: #{tpu_custom_call.1} parent=47 // pred_check
          %p1223 = pneg %p153
        $region50: #{tpu_custom_call.1} parent=47 // pred_check_branch
          %1225 = sbr.rel (%p1223) target = $region52
        $region51: #{tpu_custom_call.1} parent=47 // pred_region
          %s1226 = sand.u32 %s138, 1
          %s1227 = scalar_lea.sflag [#allocation3], %s1226
          %s1228 = sand.u32 %s138, 1
          %s1229 = smul.addr %s1228, 512
          %s1230 = scalar_lea.vmem [#allocation2], %s1229
          %1231 = dma.done %s1227, 8192
        $region52: #{tpu_custom_call.1} parent=47 // pred_fallthru
          _
      $region48: #{tpu_custom_call.1} parent=5 // pred_fallthru
        _
    $region6: #{tpu_custom_call.1} parent=1 // loop_footer
      %s18 = sadd.s32 1, %s14
    $region7: #{tpu_custom_call.1} parent=1 // loop_footer_branch
      %13 = sbr.rel target = $region3
    $region8: #{tpu_custom_call.1} parent=1 // loop_exit
      _
    %1232 = vsyncpa [#allocation3], 1
    %s1233 = scalar_lea.sflag [#allocation3], 1
    %1234 = vsyncpa %s1233, 1

</llo_original>
